<compile_context>
chip_gen: v7x
topology: tpu7x:2x2x1
jax: 0.10.0
libtpu: 0.0.40
codegen_flags: <defaults>
</compile_context>

<pallas_src>
import functools

import jax
import jax.numpy as jnp
from jax.experimental import pallas as pl
from jax.experimental.pallas import tpu as pltpu


def _round_up(x: int, m: int) -> int:
    return (x + m - 1) // m * m


def _vmem_budget_bytes() -> int:
    """Per-generation VMEM budget for the working set (tiles + temps)."""
    try:
        cap = int(pltpu.get_tpu_info().vmem_capacity_bytes)
    except Exception:
        cap = 64 * 1024 * 1024  # conservative fallback (v7x per-TC physical)
    # v5e/v6e (128 MiB) -> 64 MiB budget;  v7x (64 MiB/TC) -> 32 MiB budget.
    return min(cap // 2, 96 * 1024 * 1024)


def _choose_row_tile(rows: int, features: int, in_itemsize: int, out_itemsize: int,
                     budget: int) -> int:
    """Largest row tile (multiple of 8) fitting the VMEM budget; >=2 grid steps if possible."""
    f_phys = _round_up(features, 128)  # physical lane footprint in VMEM
    # Per-row cost: double-buffered input + output tiles plus ~3 f32 full-tile temporaries
    # live inside the kernel body.
    bytes_per_row = f_phys * (2 * in_itemsize + 2 * out_itemsize + 3 * 4)
    cap = max(8, min(4096, (int(budget * 0.9) // bytes_per_row) // 8 * 8))
    rows8 = _round_up(rows, 8)
    tile = min(rows8, cap)
    # Guarantee at least 2 grid steps (v7x: shard rows over both TensorCores).
    if tile >= rows8 and rows8 > 8:
        tile = max(8, _round_up(rows8 // 2, 8))
    return tile


def _layernorm_kernel(x_ref, alpha_ref, beta_ref, o_ref, *, eps: float):
    x = x_ref[...].astype(jnp.float32)                         # (T, F)
    f = x.shape[-1]

    # Two-pass statistics: x is already resident in VMEM, so the second VPU pass is free
    # under the HBM roofline and avoids the catastrophic cancellation of sumsq - mean^2.
    mean = jnp.sum(x, axis=-1, keepdims=True) * jnp.float32(1.0 / f)      # (T, 1)
    d = x - mean                                                          # reused below
    var = jnp.sum(d * d, axis=-1, keepdims=True) * jnp.float32(1.0 / (f - 1))
    std = jnp.sqrt(var)

    denom = std + jnp.float32(eps)
    inv = pl.reciprocal(denom, approx=True)                    # EUP vrcp, (T, 1)
    inv = inv * (jnp.float32(2.0) - denom * inv)               # one NR step, column-only

    alpha = alpha_ref[...].astype(jnp.float32)                 # (1, F)
    beta = beta_ref[...].astype(jnp.float32)                   # (1, F)
    # Boundary-block OOB rows hold garbage, but all ops are row-local and Pallas masks
    # the out-of-bounds stores, so valid rows are unaffected.
    o_ref[...] = (d * inv * alpha + beta).astype(o_ref.dtype)


def encoder_forward(x, mask, alpha, beta, *, eps: float = 1e-6, row_tile: int | None = None):
    """Encoder.forward: (empty layer list) -> LayerNormalization(x).

    x:     (batch, seq, features)
    mask:  unused by the norm (consumed only by the injected sub-layers)
    alpha: (features,)   scale
    beta:  (features,)   shift
    """
    del mask  # only used by the (absent) sub-layers
    B, S, F = x.shape
    assert F >= 2, "LayerNormalization with unbiased std requires features >= 2"
    rows = B * S

    budget = _vmem_budget_bytes()
    itemsize = jnp.dtype(x.dtype).itemsize
    if row_tile is None:
        row_tile = _choose_row_tile(rows, F, itemsize, itemsize, budget)
    row_tile = max(8, _round_up(row_tile, 8))

    x2d = x.reshape(rows, F)
    alpha2d = alpha.reshape(1, F)
    beta2d = beta.reshape(1, F)

    kernel = functools.partial(_layernorm_kernel, eps=eps)
    num_steps = pl.cdiv(rows, row_tile)

    out2d = pl.pallas_call(
        kernel,
        out_shape=jax.ShapeDtypeStruct((rows, F), x.dtype),
        grid_spec=pltpu.PrefetchScalarGridSpec(
            num_scalar_prefetch=0,
            grid=(num_steps,),
            in_specs=[
                # Last dim == full array dim (legal even when F % 128 != 0); no pad copy.
                pl.BlockSpec((row_tile, F), lambda i: (i, 0)),
                pl.BlockSpec((1, F), lambda i: (0, 0)),        # resident across grid
                pl.BlockSpec((1, F), lambda i: (0, 0)),        # resident across grid
            ],
            out_specs=pl.BlockSpec((row_tile, F), lambda i: (i, 0)),
        ),
        compiler_params=pltpu.CompilerParams(
            dimension_semantics=("parallel",),                 # v7x: shard rows over 2 TCs
            vmem_limit_bytes=budget,                           # aligned with tile chooser
        ),
    )(x2d, alpha2d, beta2d)

    return out2d.reshape(B, S, F)


def _reference(x, alpha, beta, eps=1e-6):
    x32 = x.astype(jnp.float32)
    mean = jnp.mean(x32, axis=-1, keepdims=True)
    std = jnp.std(x32, axis=-1, keepdims=True, ddof=1)
    return (alpha * (x32 - mean) / (std + eps) + beta).astype(x.dtype)


if __name__ == "__main__":
    key = jax.random.PRNGKey(0)

    # Case 1: small shapes matching the module spec (F < 128, rows not huge).
    batch, seq, features = 2, 8, 32
    kx, key = jax.random.split(key)
    x = jax.random.normal(kx, (batch, seq, features), dtype=jnp.float32)
    mask = jnp.ones((batch, 1, seq, seq), dtype=jnp.float32)  # unused (no sub-layers)
    alpha = jnp.ones((features,), dtype=jnp.float32)          # LayerNormalization init
    beta = jnp.zeros((features,), dtype=jnp.float32)

    out = jax.block_until_ready(encoder_forward(x, mask, alpha, beta))
    ref = _reference(x, alpha, beta)
    assert out.shape == (batch, seq, features)
    assert jnp.allclose(out, ref, atol=1e-4, rtol=1e-4), "mismatch vs reference (case 1)"

    # Case 2: lane-dense, multi-tile path (rows > row_tile, F % 128 == 0), with a DC
    # offset to exercise the two-pass statistics.
    batch2, seq2, features2 = 4, 512, 256
    kx2, ka, kb = jax.random.split(key, 3)
    x2 = 100.0 + jax.random.normal(kx2, (batch2, seq2, features2), dtype=jnp.float32)
    mask2 = jnp.ones((batch2, 1, seq2, seq2), dtype=jnp.float32)
    alpha2 = 1.0 + 0.1 * jax.random.normal(ka, (features2,), dtype=jnp.float32)
    beta2 = 0.1 * jax.random.normal(kb, (features2,), dtype=jnp.float32)

    out2 = jax.block_until_ready(encoder_forward(x2, mask2, alpha2, beta2))
    ref2 = _reference(x2, alpha2, beta2)
    assert out2.shape == (batch2, seq2, features2)
    assert jnp.allclose(out2, ref2, atol=1e-4, rtol=1e-4), "mismatch vs reference (case 2)"

    # Case 3: ragged rows (rows % row_tile != 0) — boundary block write-masking path.
    batch3, seq3, features3 = 3, 40, 96
    kx3, key = jax.random.split(key)
    x3 = jax.random.normal(kx3, (batch3, seq3, features3), dtype=jnp.float32)
    mask3 = jnp.ones((batch3, 1, seq3, seq3), dtype=jnp.float32)
    alpha3 = jnp.ones((features3,), dtype=jnp.float32)
    beta3 = jnp.zeros((features3,), dtype=jnp.float32)

    out3 = jax.block_until_ready(
        encoder_forward(x3, mask3, alpha3, beta3, row_tile=64))
    ref3 = _reference(x3, alpha3, beta3)
    assert out3.shape == (batch3, seq3, features3)
    assert jnp.allclose(out3, ref3, atol=1e-4, rtol=1e-4), "mismatch vs reference (case 3)"

    print("KERNEL_OK")
</pallas_src>

<mosaic_0001>
module attributes {stable_mosaic.version = 11 : i64} {
  func.func @_layernorm_kernel(%arg0: i32, %arg1: memref<8x32xf32, #tpu.memory_space<vmem>>, %arg2: memref<1x32xf32, #tpu.memory_space<vmem>>, %arg3: memref<1x32xf32, #tpu.memory_space<vmem>>, %arg4: memref<8x32xf32, #tpu.memory_space<vmem>>) attributes {dimension_semantics = [#tpu.dimension_semantics<parallel>], iteration_bounds = array<i64: 2>, scalar_prefetch = 0 : i64, scratch_operands = 0 : i64, tpu.core_type = #tpu.core_type<tc>, window_params = [{transform_indices = @transform_0, window_bounds = array<i64: 8, 32>}, {pipeline_mode = #tpu.pipeline_mode<synchronous>, transform_indices = @transform_1, window_bounds = array<i64: 1, 32>}, {pipeline_mode = #tpu.pipeline_mode<synchronous>, transform_indices = @transform_2, window_bounds = array<i64: 1, 32>}, {transform_indices = @transform_3, window_bounds = array<i64: 8, 32>}]} {
    %c0 = arith.constant 0 : index
    %c0_0 = arith.constant 0 : index
    %0 = vector.load %arg1[%c0, %c0_0] : memref<8x32xf32, #tpu.memory_space<vmem>>, vector<8x32xf32>
    %cst = arith.constant dense<0.000000e+00> : vector<8xf32>
    %1 = vector.multi_reduction <add>, %0, %cst [1] : vector<8x32xf32> to vector<8xf32>
    %2 = vector.shape_cast %1 : vector<8xf32> to vector<8x1xf32>
    %cst_1 = arith.constant 3.125000e-02 : f32
    %3 = vector.broadcast %cst_1 : f32 to vector<8x1xf32>
    %4 = arith.mulf %2, %3 : vector<8x1xf32>
    %5 = vector.broadcast %4 : vector<8x1xf32> to vector<8x32xf32>
    %6 = arith.subf %0, %5 : vector<8x32xf32>
    %7 = arith.mulf %6, %6 : vector<8x32xf32>
    %cst_2 = arith.constant dense<0.000000e+00> : vector<8xf32>
    %8 = vector.multi_reduction <add>, %7, %cst_2 [1] : vector<8x32xf32> to vector<8xf32>
    %9 = vector.shape_cast %8 : vector<8xf32> to vector<8x1xf32>
    %cst_3 = arith.constant 0.0322580636 : f32
    %10 = vector.broadcast %cst_3 : f32 to vector<8x1xf32>
    %11 = arith.mulf %9, %10 : vector<8x1xf32>
    %12 = math.sqrt %11 : vector<8x1xf32>
    %cst_4 = arith.constant 9.99999997E-7 : f32
    %13 = vector.broadcast %cst_4 : f32 to vector<8x1xf32>
    %14 = arith.addf %12, %13 : vector<8x1xf32>
    %15 = tpu.reciprocal %14 {approx = true} : vector<8x1xf32> -> vector<8x1xf32>
    %16 = arith.mulf %14, %15 : vector<8x1xf32>
    %cst_5 = arith.constant 2.000000e+00 : f32
    %17 = vector.broadcast %cst_5 : f32 to vector<8x1xf32>
    %18 = arith.subf %17, %16 : vector<8x1xf32>
    %19 = arith.mulf %15, %18 : vector<8x1xf32>
    %c0_6 = arith.constant 0 : index
    %c0_7 = arith.constant 0 : index
    %20 = vector.load %arg2[%c0_6, %c0_7] : memref<1x32xf32, #tpu.memory_space<vmem>>, vector<1x32xf32>
    %c0_8 = arith.constant 0 : index
    %c0_9 = arith.constant 0 : index
    %21 = vector.load %arg3[%c0_8, %c0_9] : memref<1x32xf32, #tpu.memory_space<vmem>>, vector<1x32xf32>
    %22 = vector.broadcast %19 : vector<8x1xf32> to vector<8x32xf32>
    %23 = arith.mulf %6, %22 : vector<8x32xf32>
    %24 = vector.broadcast %20 : vector<1x32xf32> to vector<8x32xf32>
    %25 = arith.mulf %23, %24 : vector<8x32xf32>
    %26 = vector.broadcast %21 : vector<1x32xf32> to vector<8x32xf32>
    %27 = arith.addf %25, %26 : vector<8x32xf32>
    %c0_10 = arith.constant 0 : index
    %c0_11 = arith.constant 0 : index
    %28 = vector.load %arg4[%c0_10, %c0_11] : memref<8x32xf32, #tpu.memory_space<vmem>>, vector<8x32xf32>
    tpu.vector_store %arg4[%c0_10, %c0_11], %27 {strides = array<i32>} : memref<8x32xf32, #tpu.memory_space<vmem>>, vector<8x32xf32>,
    return
  }
  func.func @transform_0(%arg0: i32) -> (i32, i32) {
    %c0_i32 = arith.constant 0 : i32
    %c0_i32_0 = arith.constant 0 : i32
    return %arg0, %c0_i32 : i32, i32
  }
  func.func @transform_1(%arg0: i32) -> (i32, i32) {
    %c0_i32 = arith.constant 0 : i32
    %c0_i32_0 = arith.constant 0 : i32
    %c0_i32_1 = arith.constant 0 : i32
    return %c0_i32, %c0_i32_0 : i32, i32
  }
  func.func @transform_2(%arg0: i32) -> (i32, i32) {
    %c0_i32 = arith.constant 0 : i32
    %c0_i32_0 = arith.constant 0 : i32
    %c0_i32_1 = arith.constant 0 : i32
    return %c0_i32, %c0_i32_0 : i32, i32
  }
  func.func @transform_3(%arg0: i32) -> (i32, i32) {
    %c0_i32 = arith.constant 0 : i32
    %c0_i32_0 = arith.constant 0 : i32
    return %arg0, %c0_i32 : i32, i32
  }
}

</mosaic_0001>

<llo_original>
// kernel: tpu_custom_call.1
$region0: #{tpu_custom_call.1}
  #allocation0 [shape = 'u32[]', space=smem, size = 0x4, offset = 0x4, fixed_abs, tag = 'smem constant byte address 0x4 - core index']
  #allocation1 [shape = 'u32[144,128]{1,0:T(1,128)}', space=vmem, size = 0x12000, scoped, tag = 'internal scratch']
  %s0 = inlined_call_operand.hbm [shape: f32[16,32], index: 0, kind: input, shape index: {}]
  %s1 = inlined_call_operand.vmem [shape: f32[1,32], index: 1, kind: input, shape index: {}]
  %s2 = inlined_call_operand.vmem [shape: f32[1,32], index: 2, kind: input, shape index: {}]
  %s3 = inlined_call_operand.hbm [shape: f32[16,32], index: 3, kind: output, shape index: {}]
  %s4 = sld [smem:[#allocation0]]
  $region49: #{tpu_custom_call.1} parent=0
    _
  %s6 = ssub.s32 1, %s4
  %s7 = scalar_select 0, %s6, %s4
  $region1: #{tpu_custom_call.1} parent=0
    #allocation2 [shape = 'u8[8192]{0}', space=vmem, size = 0x2000, scoped, tag = 'input window, operand 0']
    #allocation3 [shape = 's32[2]{0}', space=sflag, size = 0x8, scoped, tag = 'scoped memory for tpu_custom_call.1']
    #allocation4 [shape = 's32[2]{0}', space=sflag, size = 0x8, scoped, tag = 'scoped memory for tpu_custom_call.1']
    #allocation5 [shape = 'u8[8192]{0}', space=vmem, size = 0x2000, scoped, tag = 'output window, operand 0']
    %8 = vsyncpa [#allocation3], 0
    %s9 = scalar_lea.sflag [#allocation3], 1
    %10 = vsyncpa %s9, 0
    %11 = vsyncpa [#allocation4], 0
    %s12 = scalar_lea.sflag [#allocation4], 1
    %13 = vsyncpa %s12, 0
    loop: start=0, step=1, limit=4
    $region2: #{tpu_custom_call.1} parent=1 // loop_pre_header
      _
    $region3: #{tpu_custom_call.1} parent=1 // loop_header
      %s15 = sphi 0, %s19
      %p16 = scmp.ge.s32.totalorder %s15, 4
      %s25 = sphi 0, %s27
      %s28 = sphi 0, %s25
      %s29 = sphi 0, %s28
      %s45 = sphi 0, %s29
      %s49 = sphi 0, %s49
      %s51 = sphi 0, %s49
      %s52 = sphi 0, %s51
      %s66 = sphi 0, %s52
      %s70 = sphi 0, %s70
      %s72 = sphi 0, %s70
      %s73 = sphi 0, %s72
      %s87 = sphi 0, %s73
      %s93 = sphi 0, %s95
      %s96 = sphi 0, %s93
      %s97 = sphi 0, %s96
      %s113 = sphi 0, %s97
    $region4: #{tpu_custom_call.1} parent=1 // loop_header_branch
      %18 = sbr.rel (%p16) target = $region8
    $region5: #{tpu_custom_call.1} parent=1 // loop_body
      %s20 = ssub.s32 %s15, 1
      %s21 = ssub.s32 %s15, 2
      %s22 = sadd.s32 %s15, 1
      %s23 = ssub.s32 %s15, %s22
      %p24 = scmp.eq.s32.totalorder %s23, 0
      %s26 = sadd.s32 %s25, 1
      %s27 = scalar_select %p24, %s25, %s26
      %p30 = pneg %p24
      %p31 = scmp.eq.s32.totalorder %s15, 1
      %p32 = por %p30, %p31
      %p33 = scmp.ne.s32.totalorder %s25, %s28
      %p34 = scmp.eq.s32.totalorder %s15, 0
      %p35 = por %p33, %p34
      %p36 = scmp.ne.s32.totalorder %s25, %s28
      %p37 = scmp.eq.s32.totalorder %s20, 1
      %p38 = por %p36, %p37
      %p39 = scmp.ne.s32.totalorder %s28, %s29
      %p40 = scmp.eq.s32.totalorder %s20, 0
      %p41 = por %p39, %p40
      %p42 = scmp.ne.s32.totalorder %s28, %s29
      %p43 = scmp.eq.s32.totalorder %s21, 1
      %p44 = por %p42, %p43
      %p46 = scmp.ne.s32.totalorder %s29, %s45
      %p47 = scmp.eq.s32.totalorder %s21, 0
      %p48 = por %p46, %p47
      %s50 = sadd.s32 %s49, 1
      %p53 = scmp.eq.s32.totalorder %s15, 1
      %p54 = scmp.ne.s32.totalorder %s49, %s51
      %p55 = scmp.eq.s32.totalorder %s15, 0
      %p56 = por %p54, %p55
      %p57 = scmp.ne.s32.totalorder %s49, %s51
      %p58 = scmp.eq.s32.totalorder %s20, 1
      %p59 = por %p57, %p58
      %p60 = scmp.ne.s32.totalorder %s51, %s52
      %p61 = scmp.eq.s32.totalorder %s20, 0
      %p62 = por %p60, %p61
      %p63 = scmp.ne.s32.totalorder %s51, %s52
      %p64 = scmp.eq.s32.totalorder %s21, 1
      %p65 = por %p63, %p64
      %p67 = scmp.ne.s32.totalorder %s52, %s66
      %p68 = scmp.eq.s32.totalorder %s21, 0
      %p69 = por %p67, %p68
      %s71 = sadd.s32 %s70, 1
      %p74 = scmp.eq.s32.totalorder %s15, 1
      %p75 = scmp.ne.s32.totalorder %s70, %s72
      %p76 = scmp.eq.s32.totalorder %s15, 0
      %p77 = por %p75, %p76
      %p78 = scmp.ne.s32.totalorder %s70, %s72
      %p79 = scmp.eq.s32.totalorder %s20, 1
      %p80 = por %p78, %p79
      %p81 = scmp.ne.s32.totalorder %s72, %s73
      %p82 = scmp.eq.s32.totalorder %s20, 0
      %p83 = por %p81, %p82
      %p84 = scmp.ne.s32.totalorder %s72, %s73
      %p85 = scmp.eq.s32.totalorder %s21, 1
      %p86 = por %p84, %p85
      %p88 = scmp.ne.s32.totalorder %s73, %s87
      %p89 = scmp.eq.s32.totalorder %s21, 0
      %p90 = por %p88, %p89
      %s91 = ssub.s32 %s15, %s22
      %p92 = scmp.eq.s32.totalorder %s91, 0
      %s94 = sadd.s32 %s93, 1
      %s95 = scalar_select %p92, %s93, %s94
      %p98 = pneg %p92
      %p99 = scmp.eq.s32.totalorder %s15, 1
      %p100 = por %p98, %p99
      %p101 = scmp.ne.s32.totalorder %s93, %s96
      %p102 = scmp.eq.s32.totalorder %s15, 0
      %p103 = por %p101, %p102
      %p104 = scmp.ne.s32.totalorder %s93, %s96
      %p105 = scmp.eq.s32.totalorder %s20, 1
      %p106 = por %p104, %p105
      %p107 = scmp.ne.s32.totalorder %s96, %s97
      %p108 = scmp.eq.s32.totalorder %s20, 0
      %p109 = por %p107, %p108
      %p110 = scmp.ne.s32.totalorder %s96, %s97
      %p111 = scmp.eq.s32.totalorder %s21, 1
      %p112 = por %p110, %p111
      %p114 = scmp.ne.s32.totalorder %s97, %s113
      %p115 = scmp.eq.s32.totalorder %s21, 0
      %p116 = por %p114, %p115
      %p117 = scmp.le.s32.totalorder 1, %s15
      %p118 = scmp.lt.s32.totalorder %s15, 3
      %p119 = pnand %p117, %p118
      %p120 = pneg %p119
      // Predicated region
      $region9: #{tpu_custom_call.1} parent=5 // pred_check
        _
      $region10: #{tpu_custom_call.1} parent=5 // pred_check_branch
        %122 = sbr.rel (%p119) target = $region12
      $region11: #{tpu_custom_call.1} parent=5 // pred_region
        %s123 = ssub.s32 %s15, 1
        // Predicated region
        $region13: #{tpu_custom_call.1} parent=11 // pred_check
          %p124 = pneg %p62
        $region14: #{tpu_custom_call.1} parent=11 // pred_check_branch
          %126 = sbr.rel (%p124) target = $region16
        $region15: #{tpu_custom_call.1} parent=11 // pred_region
          _
        $region16: #{tpu_custom_call.1} parent=11 // pred_fallthru
          _
        // Predicated region
        $region17: #{tpu_custom_call.1} parent=11 // pred_check
          %p127 = pneg %p83
        $region18: #{tpu_custom_call.1} parent=11 // pred_check_branch
          %129 = sbr.rel (%p127) target = $region20
        $region19: #{tpu_custom_call.1} parent=11 // pred_region
          _
        $region20: #{tpu_custom_call.1} parent=11 // pred_fallthru
          _
      $region12: #{tpu_custom_call.1} parent=5 // pred_fallthru
        _
      %p130 = scmp.lt.s32.totalorder %s15, 2
      // Predicated region
      $region21: #{tpu_custom_call.1} parent=5 // pred_check
        %p131 = pneg %p130
      $region22: #{tpu_custom_call.1} parent=5 // pred_check_branch
        %133 = sbr.rel (%p131) target = $region24
      $region23: #{tpu_custom_call.1} parent=5 // pred_region
        // Predicated region
        $region25: #{tpu_custom_call.1} parent=23 // pred_check
          %p134 = pneg %p35
        $region26: #{tpu_custom_call.1} parent=23 // pred_check_branch
          %136 = sbr.rel (%p134) target = $region28
        $region27: #{tpu_custom_call.1} parent=23 // pred_region
          %s137 = sand.u32 %s25, 1
          %s138 = scalar_lea.sflag [#allocation3], %s137
          %s139 = sand.u32 %s25, 1
          %s140 = smul.addr %s139, 8
          %s141 = scalar_lea.vmem [#allocation2], %s140
          %s143 = ssub.s32 128, 128
          %144 = vsyncadd %s138, %s143
          %s145 = smul.addr %s15, 128
          %s146 = scalar_lea.hbm %s0, %s145
          %s148 = sshll.u32 %s141, 4
          %s149 = int_to_ptr.vmem [resolvable:$true] %s148
          %151 = dma.hbm_to_vmem [thread:$0]  %s146, 128, %s149, %s138
        $region28: #{tpu_custom_call.1} parent=23 // pred_fallthru
          _
      $region24: #{tpu_custom_call.1} parent=5 // pred_fallthru
        _
      %p152 = scmp.le.s32.totalorder 1, %s15
      %p153 = scmp.lt.s32.totalorder %s15, 3
      %p154 = pnand %p152, %p153
      %p155 = pneg %p154
      // Predicated region
      $region29: #{tpu_custom_call.1} parent=5 // pred_check
        _
      $region30: #{tpu_custom_call.1} parent=5 // pred_check_branch
        %157 = sbr.rel (%p154) target = $region32
      $region31: #{tpu_custom_call.1} parent=5 // pred_region
        %s158 = ssub.s32 %s15, 1
        %s159 = sand.u32 %s28, 1
        %s160 = scalar_lea.sflag [#allocation3], %s159
        %s161 = sand.u32 %s28, 1
        %s162 = smul.addr %s161, 8
        %s163 = scalar_lea.vmem [#allocation2], %s162
        // Predicated region
        $region33: #{tpu_custom_call.1} parent=31 // pred_check
          %p164 = pneg %p41
        $region34: #{tpu_custom_call.1} parent=31 // pred_check_branch
          %166 = sbr.rel (%p164) target = $region36
        $region35: #{tpu_custom_call.1} parent=31 // pred_region
          %167 = dma.done %s160, 128
        $region36: #{tpu_custom_call.1} parent=31 // pred_fallthru
          _
        %s168 = sand.u32 %s28, 1
        %s169 = scalar_lea.sflag [#allocation3], %s168
        %s170 = sand.u32 %s28, 1
        %s171 = smul.addr %s170, 8
        %s172 = scalar_lea.vmem [#allocation2], %s171
        %p173 = pneg %p41
        %p174 = pneg %p38
        %p175 = pneg %p62
        %p176 = pneg %p59
        %p177 = pneg %p83
        %p178 = pneg %p80
        %p179 = pneg %p109
        %p180 = pneg %p106
        %s181 = sand.u32 %s96, 1
        %s182 = scalar_lea.sflag [#allocation4], %s181
        %s183 = sand.u32 %s96, 1
        %s184 = smul.addr %s183, 8
        %s185 = scalar_lea.vmem [#allocation5], %s184
        %v186 = vld [vmem:[%s163] sm:$0xff]
        %vm187 = vcmask 261120
        %v188 = vsel %vm187, %v186, 0.0
        %189 = vadd.xlane.f32.xlu0 %v188
        %v190 = vpop.xlane.xlu0 %189
        %v191 = vmul.f32 %v190, 0.03125
        %v192 = vsub.f32 %v186, %v191
        %v193 = vmul.f32 %v192, %v192
        %v194 = vsel %vm187, %v193, 0.0
        %195 = vadd.xlane.f32.xlu0 %v194
        %v196 = vpop.xlane.xlu0 %195
        %v197 = vmul.f32 %v196, 0.032258064
        %v198 = vrsqrt.pop %v197
        %v199 = vmul.f32 %v197, %v198
        %vm200 = vcmp.eq.f32.partialorder %v197, inf
        %v201 = vsel %vm200, %v197, %v199
        %vm202 = vcmp.eq.f32.partialorder %v197, 0.0
        %v203 = vand.u32 %v197, 2147483648
        %v204 = vsel %vm202, %v203, %v201
        %v205 = vadd.f32 %v204, 1e-06
        %v206 = vrcp.pop %v205
        %v207 = vmul.f32 %v205, %v206
        %v208 = vsub.f32 2.0, %v207
        %v209 = vmul.f32 %v206, %v208
        %v210 = vld [vmem:[%s1] sm:$0x1]
        %v211 = vld [vmem:[%s2] sm:$0x1]
        %v212 = vmul.f32 %v192, %v209
        %v214 = vlaneseq
        %v215 = vshrl.u32 %v214, 7
        %v216 = vsub.s32 0, %v215
        %v217 = vrot.slane %v210, %v216
        %v219 = vmul.f32 %v212, %v217
        %v221 = vlaneseq
        %v222 = vshrl.u32 %v221, 7
        %v223 = vsub.s32 0, %v222
        %v224 = vrot.slane %v211, %v223
        %v226 = vadd.f32 %v219, %v224
        %227 = vst.msk [vmem:[%s185] sm:$0xff] %vm187, %v226
        %s228 = sand.u32 %s96, 1
        %s229 = scalar_lea.sflag [#allocation4], %s228
        %s230 = sand.u32 %s96, 1
        %s231 = smul.addr %s230, 8
        %s232 = scalar_lea.vmem [#allocation5], %s231
        // Predicated region
        $region37: #{tpu_custom_call.1} parent=31 // pred_check
          %p233 = pneg %p106
        $region38: #{tpu_custom_call.1} parent=31 // pred_check_branch
          %235 = sbr.rel (%p233) target = $region40
        $region39: #{tpu_custom_call.1} parent=31 // pred_region
          %s237 = ssub.s32 128, 128
          %238 = vsyncadd %s229, %s237
          %s239 = smul.addr %s20, 128
          %s240 = scalar_lea.hbm %s3, %s239
          %s242 = sshll.u32 %s232, 4
          %s243 = int_to_ptr.vmem [resolvable:$true] %s242
          %245 = dma.vmem_to_hbm [thread:$0]  %s243, 128, %s240, %s229
        $region40: #{tpu_custom_call.1} parent=31 // pred_fallthru
          _
      $region32: #{tpu_custom_call.1} parent=5 // pred_fallthru
        _
      %p246 = scmp.le.s32.totalorder 2, %s15
      // Predicated region
      $region41: #{tpu_custom_call.1} parent=5 // pred_check
        %p247 = pneg %p246
      $region42: #{tpu_custom_call.1} parent=5 // pred_check_branch
        %249 = sbr.rel (%p247) target = $region44
      $region43: #{tpu_custom_call.1} parent=5 // pred_region
        %s250 = ssub.s32 %s15, 2
        // Predicated region
        $region45: #{tpu_custom_call.1} parent=43 // pred_check
          %p251 = pneg %p112
        $region46: #{tpu_custom_call.1} parent=43 // pred_check_branch
          %253 = sbr.rel (%p251) target = $region48
        $region47: #{tpu_custom_call.1} parent=43 // pred_region
          %s254 = sand.u32 %s97, 1
          %s255 = scalar_lea.sflag [#allocation4], %s254
          %s256 = sand.u32 %s97, 1
          %s257 = smul.addr %s256, 8
          %s258 = scalar_lea.vmem [#allocation5], %s257
          %259 = dma.done %s255, 128
        $region48: #{tpu_custom_call.1} parent=43 // pred_fallthru
          _
      $region44: #{tpu_custom_call.1} parent=5 // pred_fallthru
        _
    $region6: #{tpu_custom_call.1} parent=1 // loop_footer
      %s19 = sadd.s32 1, %s15
    $region7: #{tpu_custom_call.1} parent=1 // loop_footer_branch
      %14 = sbr.rel target = $region3
    $region8: #{tpu_custom_call.1} parent=1 // loop_exit
      _
    %260 = vsyncpa [#allocation3], 1
    %s261 = scalar_lea.sflag [#allocation3], 1
    %262 = vsyncpa %s261, 1
    %263 = vsyncpa [#allocation4], 1
    %s264 = scalar_lea.sflag [#allocation4], 1
    %265 = vsyncpa %s264, 1

</llo_original>
